<compile_context>
chip_gen: v5e
topology: v5e:2x2
jax: 0.10.0
libtpu: 0.0.40
codegen_flags: <defaults>
</compile_context>

<pallas_src>
import functools

import jax
import jax.numpy as jnp
from jax import lax
from jax.experimental import pallas as pl
from jax.experimental.pallas import tpu as pltpu

EPS = 1e-5


def _stage1_kernel(x_ref, s1_ref, b1_ref, w1_ref, y_ref, sum_ref, ssq_ref):
    # x_ref : (B1, C_in, HW)  bf16   (channel-major, pixels on lanes)
    # s1/b1 : (C_in, 1)       f32
    # w1_ref: (C_mid, C_in)   bf16   (resident across grid steps)
    # y_ref : (B1, C_mid, HW) bf16
    # sum_ref / ssq_ref: (1, C_mid, 1) f32  (partial BN2 statistics for this tile)
    b1_tile = x_ref.shape[0]
    c_mid = w1_ref.shape[0]
    s1 = s1_ref[...]
    b1 = b1_ref[...]
    w1 = w1_ref[...]

    acc_sum = jnp.zeros((c_mid, 1), jnp.float32)
    acc_ssq = jnp.zeros((c_mid, 1), jnp.float32)
    for b in range(b1_tile):
        # BN1 + ReLU in f32 (x arrives bf16, upcast for the elementwise math)
        h = jnp.maximum(x_ref[b].astype(jnp.float32) * s1 + b1, 0.0)
        # 1x1 conv: (C_mid, C_in) @ (C_in, HW) on the MXU, f32 accumulation
        y = jnp.dot(w1, h.astype(w1.dtype), preferred_element_type=jnp.float32)
        y_bf = y.astype(y_ref.dtype)
        y_ref[b] = y_bf
        # BN2 partial stats on the bf16-rounded y (exactly what stage 2 consumes)
        yq = y_bf.astype(jnp.float32)
        acc_sum = acc_sum + jnp.sum(yq, axis=1, keepdims=True)
        acc_ssq = acc_ssq + jnp.sum(yq * yq, axis=1, keepdims=True)
    sum_ref[0] = acc_sum
    ssq_ref[0] = acc_ssq


def _stage2_kernel(y_ref, s2_ref, b2_ref, w2_ref, o_ref, *, H, W):
    # y_ref : (B2, C_mid, HW)     bf16
    # s2/b2 : (C_mid, 1)          f32
    # w2_ref: (C_out, 9*C_mid)    bf16   (resident across grid steps)
    # o_ref : (B2, C_out, HW)     f32    (lane-dense stores, already NCHW order)
    b2_tile, c_mid, hw = y_ref.shape
    s2 = s2_ref[...]
    b2 = b2_ref[...]
    w2 = w2_ref[...]
    mm_dtype = w2.dtype

    # Row / column index of every flat pixel position (static masks per tap).
    pos = lax.broadcasted_iota(jnp.int32, (1, hw), 1)
    yy = pos // W
    xx = pos - yy * W

    for b in range(b2_tile):
        # BN2 + ReLU in f32, cast to bf16 immediately (before tap construction).
        hb = jnp.maximum(y_ref[b].astype(jnp.float32) * s2 + b2, 0.0).astype(mm_dtype)

        # Build the (9*C_mid, HW) im2col block from masked lane rolls (XLU) —
        # no zero-pad concatenates, no strided-slice retile copies.
        taps = []
        for kh in range(3):
            for kw in range(3):
                dh, dw = kh - 1, kw - 1
                shift = dh * W + dw
                if shift == 0:
                    t = hb
                else:
                    t = pltpu.roll(hb, shift=(-shift) % hw, axis=1)
                conds = []
                if dh < 0:
                    conds.append(yy >= -dh)
                elif dh > 0:
                    conds.append(yy < H - dh)
                if dw < 0:
                    conds.append(xx >= -dw)
                elif dw > 0:
                    conds.append(xx < W - dw)
                if conds:
                    m = conds[0]
                    for c in conds[1:]:
                        m = jnp.logical_and(m, c)
                    t = jnp.where(m, t, jnp.zeros_like(t))
                taps.append(t)
        im2col = jnp.concatenate(taps, axis=0)        # (9*C_mid, HW) bf16

        # Single fused 3x3 conv matmul, K = 9*C_mid, lane-dense (C_out, HW) result.
        o_ref[b] = jnp.dot(w2, im2col,
                           preferred_element_type=jnp.float32).astype(o_ref.dtype)


def _pick_batch_tile(n, target):
    """Largest divisor of n <= target that (for n > 1) still leaves >= 2 grid steps."""
    best = 1
    for d in range(1, min(n, target) + 1):
        if n % d == 0 and (n // d >= 2 or n == 1):
            best = d
    return best


def dense_layer_bottleneck(pre_features, params, drop_rate=0.0, *,
                           images_per_step1=8, images_per_step2=8,
                           mm_dtype=jnp.bfloat16):
    if drop_rate > 0:
        # TODO(synk): dropout via pltpu.prng_* for drop_rate > 0.
        raise NotImplementedError("drop_rate > 0 is not implemented")

    x = jnp.concatenate([f.astype(jnp.float32) for f in pre_features], axis=1)  # NCHW
    N, C_in, H, W = x.shape
    HW = H * W

    w1 = params["w1"]                              # (C_mid, C_in, 1, 1)
    w2 = params["w2"]                              # (C_out, C_mid, 3, 3)
    C_mid, C_out = w1.shape[0], w2.shape[0]

    # ---- BN1 batch statistics, computed directly on the NCHW concat (f32) ----
    mu1 = jnp.mean(x, axis=(0, 2, 3))
    var1 = jnp.mean(jnp.square(x - mu1[None, :, None, None]), axis=(0, 2, 3))
    rstd1 = lax.rsqrt(var1 + EPS)
    s1 = (params["gamma1"] * rstd1).reshape(C_in, 1).astype(jnp.float32)
    b1 = (params["beta1"] - mu1 * params["gamma1"] * rstd1).reshape(C_in, 1).astype(jnp.float32)

    # Channel-major view (pixels on lanes): a free reshape of NCHW, fed as bf16.
    x_cm = x.reshape(N, C_in, HW).astype(mm_dtype)
    w1_mat = w1.reshape(C_mid, C_in).astype(mm_dtype)

    # ---- stage 1: BN1 + ReLU + 1x1 conv, grid over image tiles ----
    B1 = _pick_batch_tile(N, images_per_step1)
    g1 = N // B1
    y_cm, psum, pssq = pl.pallas_call(
        _stage1_kernel,
        out_shape=(
            jax.ShapeDtypeStruct((N, C_mid, HW), mm_dtype),
            jax.ShapeDtypeStruct((g1, C_mid, 1), jnp.float32),
            jax.ShapeDtypeStruct((g1, C_mid, 1), jnp.float32),
        ),
        grid=(g1,),
        in_specs=[
            pl.BlockSpec((B1, C_in, HW), lambda i: (i, 0, 0)),
            pl.BlockSpec((C_in, 1), lambda i: (0, 0)),
            pl.BlockSpec((C_in, 1), lambda i: (0, 0)),
            pl.BlockSpec((C_mid, C_in), lambda i: (0, 0)),
        ],
        out_specs=(
            pl.BlockSpec((B1, C_mid, HW), lambda i: (i, 0, 0)),
            pl.BlockSpec((1, C_mid, 1), lambda i: (i, 0, 0)),
            pl.BlockSpec((1, C_mid, 1), lambda i: (i, 0, 0)),
        ),
        compiler_params=pltpu.CompilerParams(
            dimension_semantics=("parallel",),
            vmem_limit_bytes=64 * 1024 * 1024),
    )(x_cm, s1, b1, w1_mat)

    # ---- BN2 batch statistics from per-tile partial sums (single pass over y) ----
    # NOTE: E[y^2]-E[y]^2 in f32 is cancellation-prone when |mean| >> std; clamped.
    total = float(N * HW)
    mu2 = jnp.sum(psum[:, :, 0], axis=0) / total
    ex2 = jnp.sum(pssq[:, :, 0], axis=0) / total
    var2 = jnp.maximum(ex2 - mu2 * mu2, 0.0)
    rstd2 = lax.rsqrt(var2 + EPS)
    s2 = (params["gamma2"] * rstd2).reshape(C_mid, 1).astype(jnp.float32)
    b2 = (params["beta2"] - mu2 * params["gamma2"] * rstd2).reshape(C_mid, 1).astype(jnp.float32)

    # 3x3 weights flattened to (C_out, 9*C_mid); K ordered (kh, kw, c) to match
    # the in-kernel im2col row order.
    w2_mat = jnp.transpose(w2, (0, 2, 3, 1)).reshape(C_out, 9 * C_mid).astype(mm_dtype)

    # ---- stage 2: fused BN2 + ReLU + 3x3 conv (pad=1), grid over image tiles ----
    B2 = _pick_batch_tile(N, images_per_step2)
    g2 = N // B2
    out_cm = pl.pallas_call(
        functools.partial(_stage2_kernel, H=H, W=W),
        out_shape=jax.ShapeDtypeStruct((N, C_out, HW), jnp.float32),
        grid=(g2,),
        in_specs=[
            pl.BlockSpec((B2, C_mid, HW), lambda i: (i, 0, 0)),
            pl.BlockSpec((C_mid, 1), lambda i: (0, 0)),
            pl.BlockSpec((C_mid, 1), lambda i: (0, 0)),
            pl.BlockSpec((C_out, 9 * C_mid), lambda i: (0, 0)),
        ],
        out_specs=pl.BlockSpec((B2, C_out, HW), lambda i: (i, 0, 0)),
        compiler_params=pltpu.CompilerParams(
            dimension_semantics=("parallel",),
            vmem_limit_bytes=64 * 1024 * 1024),
    )(y_cm, s2, b2, w2_mat)

    # Already NCHW order -> just a reshape, no final transpose / extra HBM pass.
    return out_cm.reshape(N, C_out, H, W)


def _reference(pre_features, params):
    """Pure-JAX f32 reference of the PyTorch forward (training-mode BN, no dropout)."""
    x = jnp.concatenate(pre_features, axis=1)
    mu1 = jnp.mean(x, axis=(0, 2, 3), keepdims=True)
    var1 = jnp.mean((x - mu1) ** 2, axis=(0, 2, 3), keepdims=True)
    h = (x - mu1) / jnp.sqrt(var1 + EPS)
    h = h * params["gamma1"].reshape(1, -1, 1, 1) + params["beta1"].reshape(1, -1, 1, 1)
    h = jnp.maximum(h, 0.0)
    y = lax.conv_general_dilated(h, params["w1"], (1, 1), "VALID",
                                 dimension_numbers=("NCHW", "OIHW", "NCHW"))
    mu2 = jnp.mean(y, axis=(0, 2, 3), keepdims=True)
    var2 = jnp.mean((y - mu2) ** 2, axis=(0, 2, 3), keepdims=True)
    h2 = (y - mu2) / jnp.sqrt(var2 + EPS)
    h2 = h2 * params["gamma2"].reshape(1, -1, 1, 1) + params["beta2"].reshape(1, -1, 1, 1)
    h2 = jnp.maximum(h2, 0.0)
    return lax.conv_general_dilated(h2, params["w2"], (1, 1), ((1, 1), (1, 1)),
                                    dimension_numbers=("NCHW", "OIHW", "NCHW"))


if __name__ == "__main__":
    # Two pre-feature maps of 4 channels each -> num_input_features=8,
    # growth_rate=4, bn_size=4 -> C_mid=16, C_out=4; batch=2, spatial=16x16.
    N, H, W = 2, 16, 16
    growth_rate, bn_size = 4, 4
    c_each = 4
    C_in = 2 * c_each
    C_mid = bn_size * growth_rate
    C_out = growth_rate

    key = jax.random.PRNGKey(0)
    ks = jax.random.split(key, 8)
    pre_features = [
        jax.random.normal(ks[0], (N, c_each, H, W), jnp.float32),
        jax.random.normal(ks[1], (N, c_each, H, W), jnp.float32),
    ]
    params = {
        "gamma1": jax.random.uniform(ks[2], (C_in,), jnp.float32, 0.5, 1.5),
        "beta1": 0.1 * jax.random.normal(ks[3], (C_in,), jnp.float32),
        "w1": 0.1 * jax.random.normal(ks[4], (C_mid, C_in, 1, 1), jnp.float32),
        "gamma2": jax.random.uniform(ks[5], (C_mid,), jnp.float32, 0.5, 1.5),
        "beta2": 0.1 * jax.random.normal(ks[6], (C_mid,), jnp.float32),
        "w2": 0.1 * jax.random.normal(ks[7], (C_out, C_mid, 3, 3), jnp.float32),
    }

    out = dense_layer_bottleneck(pre_features, params, drop_rate=0.0)
    out = jax.block_until_ready(out)

    ref = jax.block_until_ready(_reference(pre_features, params))
    assert out.shape == (N, C_out, H, W), out.shape
    max_err = float(jnp.max(jnp.abs(out - ref)))
    rel_l2 = float(jnp.linalg.norm(out - ref) / (jnp.linalg.norm(ref) + 1e-12))
    # bf16 inputs + bf16 matmul operands (f32 accumulation) vs f32 reference.
    assert max_err < 1e-1 and rel_l2 < 3e-2, (max_err, rel_l2)
    print("KERNEL_OK")
</pallas_src>

<mosaic_0001>
module attributes {stable_mosaic.version = 11 : i64} {
  func.func @_stage1_kernel(%arg0: i32, %arg1: memref<1x8x256xbf16, #tpu.memory_space<vmem>>, %arg2: memref<8x1xf32, #tpu.memory_space<vmem>>, %arg3: memref<8x1xf32, #tpu.memory_space<vmem>>, %arg4: memref<16x8xbf16, #tpu.memory_space<vmem>>, %arg5: memref<1x16x256xbf16, #tpu.memory_space<vmem>>, %arg6: memref<1x16x1xf32, #tpu.memory_space<vmem>>, %arg7: memref<1x16x1xf32, #tpu.memory_space<vmem>>) attributes {dimension_semantics = [#tpu.dimension_semantics<parallel>], iteration_bounds = array<i64: 2>, scalar_prefetch = 0 : i64, scratch_operands = 0 : i64, tpu.core_type = #tpu.core_type<tc>, window_params = [{transform_indices = @transform_0, window_bounds = array<i64: 1, 8, 256>}, {pipeline_mode = #tpu.pipeline_mode<synchronous>, transform_indices = @transform_1, window_bounds = array<i64: 8, 1>}, {pipeline_mode = #tpu.pipeline_mode<synchronous>, transform_indices = @transform_2, window_bounds = array<i64: 8, 1>}, {pipeline_mode = #tpu.pipeline_mode<synchronous>, transform_indices = @transform_3, window_bounds = array<i64: 16, 8>}, {transform_indices = @transform_4, window_bounds = array<i64: 1, 16, 256>}, {transform_indices = @transform_5, window_bounds = array<i64: 1, 16, 1>}, {transform_indices = @transform_6, window_bounds = array<i64: 1, 16, 1>}]} {
    %c0 = arith.constant 0 : index
    %c0_0 = arith.constant 0 : index
    %0 = vector.load %arg2[%c0, %c0_0] : memref<8x1xf32, #tpu.memory_space<vmem>>, vector<8x1xf32>
    %c0_1 = arith.constant 0 : index
    %c0_2 = arith.constant 0 : index
    %1 = vector.load %arg3[%c0_1, %c0_2] : memref<8x1xf32, #tpu.memory_space<vmem>>, vector<8x1xf32>
    %c0_3 = arith.constant 0 : index
    %c0_4 = arith.constant 0 : index
    %2 = vector.load %arg4[%c0_3, %c0_4] : memref<16x8xbf16, #tpu.memory_space<vmem>>, vector<16x8xbf16>
    %cst = arith.constant 0.000000e+00 : f32
    %3 = vector.broadcast %cst : f32 to vector<16x1xf32>
    %cst_5 = arith.constant 0.000000e+00 : f32
    %4 = vector.broadcast %cst_5 : f32 to vector<16x1xf32>
    %c0_6 = arith.constant 0 : index
    %c0_7 = arith.constant 0 : index
    %c0_8 = arith.constant 0 : index
    %5 = vector.load %arg1[%c0_6, %c0_7, %c0_8] : memref<1x8x256xbf16, #tpu.memory_space<vmem>>, vector<1x8x256xbf16>
    %6 = vector.shape_cast %5 : vector<1x8x256xbf16> to vector<8x256xbf16>
    %7 = arith.extf %6 : vector<8x256xbf16> to vector<8x256xf32>
    %8 = vector.broadcast %0 : vector<8x1xf32> to vector<8x256xf32>
    %9 = arith.mulf %7, %8 : vector<8x256xf32>
    %10 = vector.broadcast %1 : vector<8x1xf32> to vector<8x256xf32>
    %11 = arith.addf %9, %10 : vector<8x256xf32>
    %cst_9 = arith.constant 0.000000e+00 : f32
    %12 = vector.broadcast %cst_9 : f32 to vector<8x256xf32>
    %13 = arith.maximumf %11, %12 : vector<8x256xf32>
    %14 = arith.truncf %13 : vector<8x256xf32> to vector<8x256xbf16>
    %cst_10 = arith.constant dense<0.000000e+00> : vector<16x256xf32>
    %15 = tpu.matmul %2, %14, %cst_10 {dimension_numbers = #tpu.dot_dimension_numbers<[1], [0], [0], [1], [0, 0, 1, 1], [], []>} : vector<16x8xbf16>, vector<8x256xbf16>, vector<16x256xf32> -> vector<16x256xf32>
    %16 = arith.truncf %15 : vector<16x256xf32> to vector<16x256xbf16>
    %c0_11 = arith.constant 0 : index
    %c0_12 = arith.constant 0 : index
    %c0_13 = arith.constant 0 : index
    %17 = vector.load %arg5[%c0_11, %c0_12, %c0_13] : memref<1x16x256xbf16, #tpu.memory_space<vmem>>, vector<1x16x256xbf16>
    %18 = vector.shape_cast %17 : vector<1x16x256xbf16> to vector<16x256xbf16>
    %19 = vector.shape_cast %16 : vector<16x256xbf16> to vector<1x16x256xbf16>
    tpu.vector_store %arg5[%c0_11, %c0_12, %c0_13], %19 {strides = array<i32>} : memref<1x16x256xbf16, #tpu.memory_space<vmem>>, vector<1x16x256xbf16>,
    %20 = arith.extf %16 : vector<16x256xbf16> to vector<16x256xf32>
    %cst_14 = arith.constant dense<0.000000e+00> : vector<16xf32>
    %21 = vector.multi_reduction <add>, %20, %cst_14 [1] : vector<16x256xf32> to vector<16xf32>
    %22 = vector.shape_cast %21 : vector<16xf32> to vector<16x1xf32>
    %23 = arith.addf %3, %22 : vector<16x1xf32>
    %24 = arith.mulf %20, %20 : vector<16x256xf32>
    %cst_15 = arith.constant dense<0.000000e+00> : vector<16xf32>
    %25 = vector.multi_reduction <add>, %24, %cst_15 [1] : vector<16x256xf32> to vector<16xf32>
    %26 = vector.shape_cast %25 : vector<16xf32> to vector<16x1xf32>
    %27 = arith.addf %4, %26 : vector<16x1xf32>
    %c0_16 = arith.constant 0 : index
    %c0_17 = arith.constant 0 : index
    %c0_18 = arith.constant 0 : index
    %28 = vector.load %arg6[%c0_16, %c0_17, %c0_18] : memref<1x16x1xf32, #tpu.memory_space<vmem>>, vector<1x16x1xf32>
    %29 = vector.shape_cast %28 : vector<1x16x1xf32> to vector<16x1xf32>
    %30 = vector.shape_cast %23 : vector<16x1xf32> to vector<1x16x1xf32>
    tpu.vector_store %arg6[%c0_16, %c0_17, %c0_18], %30 {strides = array<i32>} : memref<1x16x1xf32, #tpu.memory_space<vmem>>, vector<1x16x1xf32>,
    %c0_19 = arith.constant 0 : index
    %c0_20 = arith.constant 0 : index
    %c0_21 = arith.constant 0 : index
    %31 = vector.load %arg7[%c0_19, %c0_20, %c0_21] : memref<1x16x1xf32, #tpu.memory_space<vmem>>, vector<1x16x1xf32>
    %32 = vector.shape_cast %31 : vector<1x16x1xf32> to vector<16x1xf32>
    %33 = vector.shape_cast %27 : vector<16x1xf32> to vector<1x16x1xf32>
    tpu.vector_store %arg7[%c0_19, %c0_20, %c0_21], %33 {strides = array<i32>} : memref<1x16x1xf32, #tpu.memory_space<vmem>>, vector<1x16x1xf32>,
    return
  }
  func.func @transform_0(%arg0: i32) -> (i32, i32, i32) {
    %c0_i32 = arith.constant 0 : i32
    %c0_i32_0 = arith.constant 0 : i32
    %c0_i32_1 = arith.constant 0 : i32
    return %arg0, %c0_i32, %c0_i32_0 : i32, i32, i32
  }
  func.func @transform_1(%arg0: i32) -> (i32, i32) {
    %c0_i32 = arith.constant 0 : i32
    %c0_i32_0 = arith.constant 0 : i32
    %c0_i32_1 = arith.constant 0 : i32
    return %c0_i32, %c0_i32_0 : i32, i32
  }
  func.func @transform_2(%arg0: i32) -> (i32, i32) {
    %c0_i32 = arith.constant 0 : i32
    %c0_i32_0 = arith.constant 0 : i32
    %c0_i32_1 = arith.constant 0 : i32
    return %c0_i32, %c0_i32_0 : i32, i32
  }
  func.func @transform_3(%arg0: i32) -> (i32, i32) {
    %c0_i32 = arith.constant 0 : i32
    %c0_i32_0 = arith.constant 0 : i32
    %c0_i32_1 = arith.constant 0 : i32
    return %c0_i32, %c0_i32_0 : i32, i32
  }
  func.func @transform_4(%arg0: i32) -> (i32, i32, i32) {
    %c0_i32 = arith.constant 0 : i32
    %c0_i32_0 = arith.constant 0 : i32
    %c0_i32_1 = arith.constant 0 : i32
    return %arg0, %c0_i32, %c0_i32_0 : i32, i32, i32
  }
  func.func @transform_5(%arg0: i32) -> (i32, i32, i32) {
    %c0_i32 = arith.constant 0 : i32
    %c0_i32_0 = arith.constant 0 : i32
    %c0_i32_1 = arith.constant 0 : i32
    return %arg0, %c0_i32, %c0_i32_0 : i32, i32, i32
  }
  func.func @transform_6(%arg0: i32) -> (i32, i32, i32) {
    %c0_i32 = arith.constant 0 : i32
    %c0_i32_0 = arith.constant 0 : i32
    %c0_i32_1 = arith.constant 0 : i32
    return %arg0, %c0_i32, %c0_i32_0 : i32, i32, i32
  }
}

</mosaic_0001>

<llo_original>
// kernel: tpu_custom_call.1
$region0: #{tpu_custom_call.1}
  #allocation0 [shape = 'u32[]', space=smem, size = 0x4, offset = 0x4, fixed_abs, tag = 'smem constant byte address 0x4 - core index']
  #allocation1 [shape = 'u32[72,128]{1,0:T(1,128)}', space=vmem, size = 0x9000, scoped, tag = 'internal scratch']
  %s0 = inlined_call_operand.vmem [shape: bf16[2,8,256], index: 0, kind: input, shape index: {}]
  %s1 = inlined_call_operand.vmem [shape: f32[8,1], index: 1, kind: input, shape index: {}]
  %s2 = inlined_call_operand.vmem [shape: f32[8,1], index: 2, kind: input, shape index: {}]
  %s3 = inlined_call_operand.vmem [shape: bf16[16,8], index: 3, kind: input, shape index: {}]
  %s4 = inlined_call_operand.hbm [shape: bf16[2,16,256], index: 4, kind: output, shape index: {0}]
  %s5 = inlined_call_operand.vmem [shape: f32[2,16,1], index: 5, kind: output, shape index: {1}]
  %s6 = inlined_call_operand.vmem [shape: f32[2,16,1], index: 6, kind: output, shape index: {2}]
  %7 = xla_tuple %s4, %s5, %s6
  %s8 = sld [smem:[#allocation0]]
  $region65: #{tpu_custom_call.1} parent=0
    _
  %s10 = ssub.s32 1, %s8
  %s11 = scalar_select 0, %s10, %s8
  $region1: #{tpu_custom_call.1} parent=0
    #allocation2 [shape = 'u8[16384]{0}', space=vmem, size = 0x4000, scoped, tag = 'output window, operand 0']
    #allocation3 [shape = 's32[2]{0}', space=sflag, size = 0x8, scoped, tag = 'scoped memory for tpu_custom_call.1']
    %12 = vsyncpa [#allocation3], 0
    %s13 = scalar_lea.sflag [#allocation3], 1
    %14 = vsyncpa %s13, 0
    loop: start=0, step=1, limit=4
    $region2: #{tpu_custom_call.1} parent=1 // loop_pre_header
      _
    $region3: #{tpu_custom_call.1} parent=1 // loop_header
      %s16 = sphi 0, %s20
      %p17 = scmp.ge.s32.totalorder %s16, 4
      %s26 = sphi 0, %s28
      %s29 = sphi 0, %s26
      %s30 = sphi 0, %s29
      %s46 = sphi 0, %s30
      %s50 = sphi 0, %s50
      %s52 = sphi 0, %s50
      %s53 = sphi 0, %s52
      %s67 = sphi 0, %s53
      %s71 = sphi 0, %s71
      %s73 = sphi 0, %s71
      %s74 = sphi 0, %s73
      %s88 = sphi 0, %s74
      %s92 = sphi 0, %s92
      %s94 = sphi 0, %s92
      %s95 = sphi 0, %s94
      %s109 = sphi 0, %s95
      %s115 = sphi 0, %s117
      %s118 = sphi 0, %s115
      %s119 = sphi 0, %s118
      %s135 = sphi 0, %s119
      %s141 = sphi 0, %s143
      %s144 = sphi 0, %s141
      %s145 = sphi 0, %s144
      %s161 = sphi 0, %s145
      %s167 = sphi 0, %s169
      %s170 = sphi 0, %s167
      %s171 = sphi 0, %s170
      %s187 = sphi 0, %s171
    $region4: #{tpu_custom_call.1} parent=1 // loop_header_branch
      %19 = sbr.rel (%p17) target = $region8
    $region5: #{tpu_custom_call.1} parent=1 // loop_body
      %s21 = ssub.s32 %s16, 1
      %s22 = ssub.s32 %s16, 2
      %s23 = sadd.s32 %s16, 1
      %s24 = ssub.s32 %s16, %s23
      %p25 = scmp.eq.s32.totalorder %s24, 0
      %s27 = sadd.s32 %s26, 1
      %s28 = scalar_select %p25, %s26, %s27
      %p31 = pneg %p25
      %p32 = scmp.eq.s32.totalorder %s16, 1
      %p33 = por %p31, %p32
      %p34 = scmp.ne.s32.totalorder %s26, %s29
      %p35 = scmp.eq.s32.totalorder %s16, 0
      %p36 = por %p34, %p35
      %p37 = scmp.ne.s32.totalorder %s26, %s29
      %p38 = scmp.eq.s32.totalorder %s21, 1
      %p39 = por %p37, %p38
      %p40 = scmp.ne.s32.totalorder %s29, %s30
      %p41 = scmp.eq.s32.totalorder %s21, 0
      %p42 = por %p40, %p41
      %p43 = scmp.ne.s32.totalorder %s29, %s30
      %p44 = scmp.eq.s32.totalorder %s22, 1
      %p45 = por %p43, %p44
      %p47 = scmp.ne.s32.totalorder %s30, %s46
      %p48 = scmp.eq.s32.totalorder %s22, 0
      %p49 = por %p47, %p48
      %s51 = sadd.s32 %s50, 1
      %p54 = scmp.eq.s32.totalorder %s16, 1
      %p55 = scmp.ne.s32.totalorder %s50, %s52
      %p56 = scmp.eq.s32.totalorder %s16, 0
      %p57 = por %p55, %p56
      %p58 = scmp.ne.s32.totalorder %s50, %s52
      %p59 = scmp.eq.s32.totalorder %s21, 1
      %p60 = por %p58, %p59
      %p61 = scmp.ne.s32.totalorder %s52, %s53
      %p62 = scmp.eq.s32.totalorder %s21, 0
      %p63 = por %p61, %p62
      %p64 = scmp.ne.s32.totalorder %s52, %s53
      %p65 = scmp.eq.s32.totalorder %s22, 1
      %p66 = por %p64, %p65
      %p68 = scmp.ne.s32.totalorder %s53, %s67
      %p69 = scmp.eq.s32.totalorder %s22, 0
      %p70 = por %p68, %p69
      %s72 = sadd.s32 %s71, 1
      %p75 = scmp.eq.s32.totalorder %s16, 1
      %p76 = scmp.ne.s32.totalorder %s71, %s73
      %p77 = scmp.eq.s32.totalorder %s16, 0
      %p78 = por %p76, %p77
      %p79 = scmp.ne.s32.totalorder %s71, %s73
      %p80 = scmp.eq.s32.totalorder %s21, 1
      %p81 = por %p79, %p80
      %p82 = scmp.ne.s32.totalorder %s73, %s74
      %p83 = scmp.eq.s32.totalorder %s21, 0
      %p84 = por %p82, %p83
      %p85 = scmp.ne.s32.totalorder %s73, %s74
      %p86 = scmp.eq.s32.totalorder %s22, 1
      %p87 = por %p85, %p86
      %p89 = scmp.ne.s32.totalorder %s74, %s88
      %p90 = scmp.eq.s32.totalorder %s22, 0
      %p91 = por %p89, %p90
      %s93 = sadd.s32 %s92, 1
      %p96 = scmp.eq.s32.totalorder %s16, 1
      %p97 = scmp.ne.s32.totalorder %s92, %s94
      %p98 = scmp.eq.s32.totalorder %s16, 0
      %p99 = por %p97, %p98
      %p100 = scmp.ne.s32.totalorder %s92, %s94
      %p101 = scmp.eq.s32.totalorder %s21, 1
      %p102 = por %p100, %p101
      %p103 = scmp.ne.s32.totalorder %s94, %s95
      %p104 = scmp.eq.s32.totalorder %s21, 0
      %p105 = por %p103, %p104
      %p106 = scmp.ne.s32.totalorder %s94, %s95
      %p107 = scmp.eq.s32.totalorder %s22, 1
      %p108 = por %p106, %p107
      %p110 = scmp.ne.s32.totalorder %s95, %s109
      %p111 = scmp.eq.s32.totalorder %s22, 0
      %p112 = por %p110, %p111
      %s113 = ssub.s32 %s16, %s23
      %p114 = scmp.eq.s32.totalorder %s113, 0
      %s116 = sadd.s32 %s115, 1
      %s117 = scalar_select %p114, %s115, %s116
      %p120 = pneg %p114
      %p121 = scmp.eq.s32.totalorder %s16, 1
      %p122 = por %p120, %p121
      %p123 = scmp.ne.s32.totalorder %s115, %s118
      %p124 = scmp.eq.s32.totalorder %s16, 0
      %p125 = por %p123, %p124
      %p126 = scmp.ne.s32.totalorder %s115, %s118
      %p127 = scmp.eq.s32.totalorder %s21, 1
      %p128 = por %p126, %p127
      %p129 = scmp.ne.s32.totalorder %s118, %s119
      %p130 = scmp.eq.s32.totalorder %s21, 0
      %p131 = por %p129, %p130
      %p132 = scmp.ne.s32.totalorder %s118, %s119
      %p133 = scmp.eq.s32.totalorder %s22, 1
      %p134 = por %p132, %p133
      %p136 = scmp.ne.s32.totalorder %s119, %s135
      %p137 = scmp.eq.s32.totalorder %s22, 0
      %p138 = por %p136, %p137
      %s139 = ssub.s32 %s16, %s23
      %p140 = scmp.eq.s32.totalorder %s139, 0
      %s142 = sadd.s32 %s141, 1
      %s143 = scalar_select %p140, %s141, %s142
      %p146 = pneg %p140
      %p147 = scmp.eq.s32.totalorder %s16, 1
      %p148 = por %p146, %p147
      %p149 = scmp.ne.s32.totalorder %s141, %s144
      %p150 = scmp.eq.s32.totalorder %s16, 0
      %p151 = por %p149, %p150
      %p152 = scmp.ne.s32.totalorder %s141, %s144
      %p153 = scmp.eq.s32.totalorder %s21, 1
      %p154 = por %p152, %p153
      %p155 = scmp.ne.s32.totalorder %s144, %s145
      %p156 = scmp.eq.s32.totalorder %s21, 0
      %p157 = por %p155, %p156
      %p158 = scmp.ne.s32.totalorder %s144, %s145
      %p159 = scmp.eq.s32.totalorder %s22, 1
      %p160 = por %p158, %p159
      %p162 = scmp.ne.s32.totalorder %s145, %s161
      %p163 = scmp.eq.s32.totalorder %s22, 0
      %p164 = por %p162, %p163
      %s165 = ssub.s32 %s16, %s23
      %p166 = scmp.eq.s32.totalorder %s165, 0
      %s168 = sadd.s32 %s167, 1
      %s169 = scalar_select %p166, %s167, %s168
      %p172 = pneg %p166
      %p173 = scmp.eq.s32.totalorder %s16, 1
      %p174 = por %p172, %p173
      %p175 = scmp.ne.s32.totalorder %s167, %s170
      %p176 = scmp.eq.s32.totalorder %s16, 0
      %p177 = por %p175, %p176
      %p178 = scmp.ne.s32.totalorder %s167, %s170
      %p179 = scmp.eq.s32.totalorder %s21, 1
      %p180 = por %p178, %p179
      %p181 = scmp.ne.s32.totalorder %s170, %s171
      %p182 = scmp.eq.s32.totalorder %s21, 0
      %p183 = por %p181, %p182
      %p184 = scmp.ne.s32.totalorder %s170, %s171
      %p185 = scmp.eq.s32.totalorder %s22, 1
      %p186 = por %p184, %p185
      %p188 = scmp.ne.s32.totalorder %s171, %s187
      %p189 = scmp.eq.s32.totalorder %s22, 0
      %p190 = por %p188, %p189
      %p191 = scmp.le.s32.totalorder 1, %s16
      %p192 = scmp.lt.s32.totalorder %s16, 3
      %p193 = pnand %p191, %p192
      %p194 = pneg %p193
      // Predicated region
      $region9: #{tpu_custom_call.1} parent=5 // pred_check
        _
      $region10: #{tpu_custom_call.1} parent=5 // pred_check_branch
        %196 = sbr.rel (%p193) target = $region12
      $region11: #{tpu_custom_call.1} parent=5 // pred_region
        %s197 = ssub.s32 %s16, 1
        // Predicated region
        $region13: #{tpu_custom_call.1} parent=11 // pred_check
          %p198 = pneg %p63
        $region14: #{tpu_custom_call.1} parent=11 // pred_check_branch
          %200 = sbr.rel (%p198) target = $region16
        $region15: #{tpu_custom_call.1} parent=11 // pred_region
          _
        $region16: #{tpu_custom_call.1} parent=11 // pred_fallthru
          _
        // Predicated region
        $region17: #{tpu_custom_call.1} parent=11 // pred_check
          %p201 = pneg %p84
        $region18: #{tpu_custom_call.1} parent=11 // pred_check_branch
          %203 = sbr.rel (%p201) target = $region20
        $region19: #{tpu_custom_call.1} parent=11 // pred_region
          _
        $region20: #{tpu_custom_call.1} parent=11 // pred_fallthru
          _
        // Predicated region
        $region21: #{tpu_custom_call.1} parent=11 // pred_check
          %p204 = pneg %p105
        $region22: #{tpu_custom_call.1} parent=11 // pred_check_branch
          %206 = sbr.rel (%p204) target = $region24
        $region23: #{tpu_custom_call.1} parent=11 // pred_region
          _
        $region24: #{tpu_custom_call.1} parent=11 // pred_fallthru
          _
      $region12: #{tpu_custom_call.1} parent=5 // pred_fallthru
        _
      %p207 = scmp.lt.s32.totalorder %s16, 2
      // Predicated region
      $region25: #{tpu_custom_call.1} parent=5 // pred_check
        %p208 = pneg %p207
      $region26: #{tpu_custom_call.1} parent=5 // pred_check_branch
        %210 = sbr.rel (%p208) target = $region28
      $region27: #{tpu_custom_call.1} parent=5 // pred_region
        // Predicated region
        $region29: #{tpu_custom_call.1} parent=27 // pred_check
          %p211 = pneg %p36
        $region30: #{tpu_custom_call.1} parent=27 // pred_check_branch
          %213 = sbr.rel (%p211) target = $region32
        $region31: #{tpu_custom_call.1} parent=27 // pred_region
          %p214 = scmp.lt.s32.totalorder %s16, 1
          %s215 = scalar_select %p214, %s16, 1
          %s216 = smul.addr %s215, 2
          %s217 = smul.addr %s216, 4
          %s218 = scalar_lea.vmem %s0, %s217
        $region32: #{tpu_custom_call.1} parent=27 // pred_fallthru
          _
      $region28: #{tpu_custom_call.1} parent=5 // pred_fallthru
        _
      %p219 = scmp.le.s32.totalorder 1, %s16
      %p220 = scmp.lt.s32.totalorder %s16, 3
      %p221 = pnand %p219, %p220
      %p222 = pneg %p221
      // Predicated region
      $region33: #{tpu_custom_call.1} parent=5 // pred_check
        _
      $region34: #{tpu_custom_call.1} parent=5 // pred_check_branch
        %224 = sbr.rel (%p221) target = $region36
      $region35: #{tpu_custom_call.1} parent=5 // pred_region
        %s225 = ssub.s32 %s16, 1
        %p226 = scmp.lt.s32.totalorder %s21, 1
        %s227 = scalar_select %p226, %s21, 1
        %s228 = smul.addr %s227, 2
        %s229 = smul.addr %s228, 4
        %s230 = scalar_lea.vmem %s0, %s229
        %p231 = pneg %p42
        %p232 = pneg %p39
        %p233 = pneg %p63
        %p234 = pneg %p60
        %p235 = pneg %p84
        %p236 = pneg %p81
        %p237 = pneg %p105
        %p238 = pneg %p102
        %p239 = pneg %p131
        %p240 = pneg %p128
        %s241 = sand.u32 %s118, 1
        %s242 = scalar_lea.sflag [#allocation3], %s241
        %s243 = sand.u32 %s118, 1
        %s244 = smul.addr %s243, 16
        %s245 = scalar_lea.vmem [#allocation2], %s244
        %p246 = pneg %p157
        %p247 = pneg %p154
        %p248 = scmp.lt.s32.totalorder %s21, 1
        %s249 = scalar_select %p248, %s21, 1
        %s250 = smul.addr %s249, 2
        %s251 = smul.addr %s250, 8
        %s252 = scalar_lea.vmem %s5, %s251
        %p253 = pneg %p183
        %p254 = pneg %p180
        %p255 = scmp.lt.s32.totalorder %s21, 1
        %s256 = scalar_select %p255, %s21, 1
        %s257 = smul.addr %s256, 2
        %s258 = smul.addr %s257, 8
        %s259 = scalar_lea.vmem %s6, %s258
        %p260 = scmp.lt.s32.totalorder %s21, 1
        %s261 = scalar_select %p260, %s21, 1
        %s262 = smul.addr %s261, 2
        %s263 = smul.addr %s262, 4
        %s264 = scalar_lea.vmem %s0, %s263
        %p265 = scmp.lt.s32.totalorder %s21, 1
        %s266 = scalar_select %p265, %s21, 1
        %s267 = smul.addr %s266, 2
        %s268 = smul.addr %s267, 8
        %s269 = scalar_lea.vmem %s5, %s268
        %p270 = scmp.lt.s32.totalorder %s21, 1
        %s271 = scalar_select %p270, %s21, 1
        %s272 = smul.addr %s271, 2
        %s273 = smul.addr %s272, 8
        %s274 = scalar_lea.vmem %s6, %s273
        %v276 = vld [vmem:[%s1] sm:$0xff]
        %v277 = vld [vmem:[%s2] sm:$0xff]
        %v278 = vld [vmem:[%s3] sm:$0xf]
        %v279 = vld [vmem:[%s3 + $0x4] sm:$0xf]
        %v280 = vld [vmem:[%s264] sm:$0xff]
        %v281 = vunpack.c.l.bf16 %v280
        %v282 = vunpack.c.h.bf16 %v280
        %284 = vset.pattern.permute.xlu0 0
        %285 = vperm.xlu0 %284, %v276
        %v286 = vpop.permute.xlu0 %285
        %v288 = vmul.f32 %v281, %v286
        %v289 = vmul.f32 %v282, %v286
        %291 = vset.pattern.permute.xlu0 0
        %292 = vperm.xlu0 %291, %v277
        %v293 = vpop.permute.xlu0 %292
        %v295 = vadd.f32 %v288, %v293
        %v296 = vadd.f32 %v289, %v293
        %v297 = vmax.f32 %v295, 0.0
        %v298 = vmax.f32 %v296, 0.0
        %v299 = vpack.c.bf16 %v297, %v297
        %v300 = vpack.c.bf16 %v298, %v298
        %v303 = vunpack.c.l.b16 %v278
        %v304 = vunpack.c.l.b16 %v279
        %v305 = vpack.c.b16 %v304, %v303
        %vm306 = vcmask 64512
        %v308 = vsel %vm306, %v305, 0
        %vm310 = vcmask 1043456
        %v312 = vsel %vm310, %v299, 0
        %v315 = vsel %vm310, %v300, 0
        %317 = vmatpush.bf16.msra.mxu0 0
        %318 = vmatpush.bf16.msra.mxu0 0
        %319 = vmatpush.bf16.msra.mxu0 0
        %320 = vmatpush.bf16.msra.mxu0 0
        %321 = vmatpush.bf16.msra.mxu0 0
        %322 = vmatpush.bf16.msra.mxu0 0
        %323 = vmatpush.bf16.msra.mxu0 0
        %324 = vmatpush.bf16.msra.mxu0 %v312
        %325 = vmatmul.bf16.gmra.mxu0 %v308
        %v326 = vpop.f32.mrf.mxu0
        %v327 = vadd.f32 0.0, %v326
        %v328 = vpop.f32.mrf.mxu0
        %v329 = vadd.f32 0.0, %v328
        %330 = vdwg.mxu0
        %331 = vmatpush.bf16.msra.mxu0 0
        %332 = vmatpush.bf16.msra.mxu0 0
        %333 = vmatpush.bf16.msra.mxu0 0
        %334 = vmatpush.bf16.msra.mxu0 0
        %335 = vmatpush.bf16.msra.mxu0 0
        %336 = vmatpush.bf16.msra.mxu0 0
        %337 = vmatpush.bf16.msra.mxu0 0
        %338 = vmatpush.bf16.msra.mxu0 %v315
        %339 = vmatmul.bf16.gmra.mxu0 %v308
        %v340 = vpop.f32.mrf.mxu0
        %v341 = vadd.f32 0.0, %v340
        %v342 = vpop.f32.mrf.mxu0
        %v343 = vadd.f32 0.0, %v342
        %344 = vdwg.mxu0
        %v345 = vpack.c.bf16 %v341, %v327
        %v346 = vpack.c.bf16 %v343, %v329
        %347 = vst [vmem:[%s245] sm:$0xff] %v345
        %348 = vst [vmem:[%s245 + $0x8] sm:$0xff] %v346
        %v349 = vunpack.c.l.bf16 %v345
        %v350 = vunpack.c.h.bf16 %v345
        %v351 = vunpack.c.l.bf16 %v346
        %v352 = vunpack.c.h.bf16 %v346
        %v353 = vadd.f32 %v349, %v350
        %354 = vadd.xlane.f32.xlu0 %v353
        %v355 = vpop.xlane.xlu0 %354
        %v356 = vadd.f32 %v351, %v352
        %357 = vadd.xlane.f32.xlu0 %v356
        %v358 = vpop.xlane.xlu0 %357
        %v359 = vadd.f32 %v355, 0.0
        %v360 = vadd.f32 %v358, 0.0
        %v361 = vmul.f32 %v349, %v349
        %v362 = vmul.f32 %v350, %v350
        %v363 = vmul.f32 %v351, %v351
        %v364 = vmul.f32 %v352, %v352
        %v365 = vadd.f32 %v361, %v362
        %366 = vadd.xlane.f32.xlu0 %v365
        %v367 = vpop.xlane.xlu0 %366
        %v368 = vadd.f32 %v363, %v364
        %369 = vadd.xlane.f32.xlu0 %v368
        %v370 = vpop.xlane.xlu0 %369
        %v371 = vadd.f32 %v367, 0.0
        %v372 = vadd.f32 %v370, 0.0
        %vm373 = vcmask 7168
        %374 = vst.msk [vmem:[%s269] sm:$0xff] %vm373, %v359
        %375 = vst.msk [vmem:[%s269 + $0x8] sm:$0xff] %vm373, %v360
        %376 = vst.msk [vmem:[%s274] sm:$0xff] %vm373, %v371
        %377 = vst.msk [vmem:[%s274 + $0x8] sm:$0xff] %vm373, %v372
        %s378 = sand.u32 %s118, 1
        %s379 = scalar_lea.sflag [#allocation3], %s378
        %s380 = sand.u32 %s118, 1
        %s381 = smul.addr %s380, 16
        %s382 = scalar_lea.vmem [#allocation2], %s381
        %p383 = scmp.lt.s32.totalorder %s21, 1
        %s384 = scalar_select %p383, %s21, 1
        %s385 = smul.addr %s384, 2
        %s386 = smul.addr %s385, 8
        %s387 = scalar_lea.vmem %s5, %s386
        %p388 = scmp.lt.s32.totalorder %s21, 1
        %s389 = scalar_select %p388, %s21, 1
        %s390 = smul.addr %s389, 2
        %s391 = smul.addr %s390, 8
        %s392 = scalar_lea.vmem %s6, %s391
        // Predicated region
        $region37: #{tpu_custom_call.1} parent=35 // pred_check
          %p393 = pneg %p128
        $region38: #{tpu_custom_call.1} parent=35 // pred_check_branch
          %395 = sbr.rel (%p393) target = $region40
        $region39: #{tpu_custom_call.1} parent=35 // pred_region
          %397 = vsyncadd %s379, 0
          %s398 = smul.addr %s21, 4
          %s399 = smul.addr %s398, 4
          %s400 = scalar_lea.hbm %s4, %s399
          %s401 = sshll.u32 %s382, 4
          %s402 = int_to_ptr.vmem [resolvable:$true] %s401
          %s403 = sshll.u32 %s400, 4
          %s404 = int_to_ptr.hbm [resolvable:$true] %s403
          %409 = dma.vmem_to_hbm [thread:$0]  %s402, 256, %s404, %s379, 128, 128, 8
        $region40: #{tpu_custom_call.1} parent=35 // pred_fallthru
          _
        // Predicated region
        $region41: #{tpu_custom_call.1} parent=35 // pred_check
          %p410 = pneg %p154
        $region42: #{tpu_custom_call.1} parent=35 // pred_check_branch
          %412 = sbr.rel (%p410) target = $region44
        $region43: #{tpu_custom_call.1} parent=35 // pred_region
          _
        $region44: #{tpu_custom_call.1} parent=35 // pred_fallthru
          _
        // Predicated region
        $region45: #{tpu_custom_call.1} parent=35 // pred_check
          %p413 = pneg %p180
        $region46: #{tpu_custom_call.1} parent=35 // pred_check_branch
          %415 = sbr.rel (%p413) target = $region48
        $region47: #{tpu_custom_call.1} parent=35 // pred_region
          _
        $region48: #{tpu_custom_call.1} parent=35 // pred_fallthru
          _
      $region36: #{tpu_custom_call.1} parent=5 // pred_fallthru
        _
      %p416 = scmp.le.s32.totalorder 2, %s16
      // Predicated region
      $region49: #{tpu_custom_call.1} parent=5 // pred_check
        %p417 = pneg %p416
      $region50: #{tpu_custom_call.1} parent=5 // pred_check_branch
        %419 = sbr.rel (%p417) target = $region52
      $region51: #{tpu_custom_call.1} parent=5 // pred_region
        %s420 = ssub.s32 %s16, 2
        // Predicated region
        $region53: #{tpu_custom_call.1} parent=51 // pred_check
          %p421 = pneg %p134
        $region54: #{tpu_custom_call.1} parent=51 // pred_check_branch
          %423 = sbr.rel (%p421) target = $region56
        $region55: #{tpu_custom_call.1} parent=51 // pred_region
          %s424 = sand.u32 %s119, 1
          %s425 = scalar_lea.sflag [#allocation3], %s424
          %s426 = sand.u32 %s119, 1
          %s427 = smul.addr %s426, 16
          %s428 = scalar_lea.vmem [#allocation2], %s427
          %430 = dma.done %s425, 256
        $region56: #{tpu_custom_call.1} parent=51 // pred_fallthru
          _
        // Predicated region
        $region57: #{tpu_custom_call.1} parent=51 // pred_check
          %p431 = pneg %p160
        $region58: #{tpu_custom_call.1} parent=51 // pred_check_branch
          %433 = sbr.rel (%p431) target = $region60
        $region59: #{tpu_custom_call.1} parent=51 // pred_region
          %p434 = scmp.lt.s32.totalorder %s22, 1
          %s435 = scalar_select %p434, %s22, 1
          %s436 = smul.addr %s435, 2
          %s437 = smul.addr %s436, 8
          %s438 = scalar_lea.vmem %s5, %s437
        $region60: #{tpu_custom_call.1} parent=51 // pred_fallthru
          _
        // Predicated region
        $region61: #{tpu_custom_call.1} parent=51 // pred_check
          %p439 = pneg %p186
        $region62: #{tpu_custom_call.1} parent=51 // pred_check_branch
          %441 = sbr.rel (%p439) target = $region64
        $region63: #{tpu_custom_call.1} parent=51 // pred_region
          %p442 = scmp.lt.s32.totalorder %s22, 1
          %s443 = scalar_select %p442, %s22, 1
          %s444 = smul.addr %s443, 2
          %s445 = smul.addr %s444, 8
          %s446 = scalar_lea.vmem %s6, %s445
        $region64: #{tpu_custom_call.1} parent=51 // pred_fallthru
          _
      $region52: #{tpu_custom_call.1} parent=5 // pred_fallthru
        _
    $region6: #{tpu_custom_call.1} parent=1 // loop_footer
      %s20 = sadd.s32 1, %s16
    $region7: #{tpu_custom_call.1} parent=1 // loop_footer_branch
      %15 = sbr.rel target = $region3
    $region8: #{tpu_custom_call.1} parent=1 // loop_exit
      _
    %447 = vsyncpa [#allocation3], 1
    %s448 = scalar_lea.sflag [#allocation3], 1
    %449 = vsyncpa %s448, 1

</llo_original>
